<compile_context>
chip_gen: v7x
topology: tpu7x:2x2x1
jax: 0.10.0
libtpu: 0.0.40
codegen_flags: <defaults>
</compile_context>

<pallas_src>
import functools

import jax
import jax.numpy as jnp
from jax.experimental import pallas as pl
from jax.experimental.pallas import tpu as pltpu


def _round_up(x, m):
    return ((x + m - 1) // m) * m


def _sublane_multiple(itemsize):
    if itemsize >= 4:
        return 8
    if itemsize == 2:
        return 16
    return 32


def _pick_tile_nc(nc, min_itemsize):
    """NC (sublane) tile: multiple of the packed-sublane width that divides NC,
    capped at 128, and capped at NC//2 whenever possible so the parallel NC
    axis has >= 2 blocks (keeps both v7x TensorCores streaming)."""
    sub = _sublane_multiple(min_itemsize)
    if nc % sub != 0:
        if nc % 8 == 0:
            sub = 8
        else:
            return nc  # full extent (always legal as a block dim)
    cap = min(128, nc)
    if nc >= 2 * sub:
        cap = min(cap, nc // 2)  # guarantee >= 2 blocks on the parallel axis
    best = sub
    d = sub
    while d <= cap:
        if nc % d == 0:
            best = d
        d += sub
    return best


def _pick_tile_s(s, tile_nc, bytes_both, requested, vmem_budget_bytes):
    """Largest 128-multiple lane tile.  If not requested, size it so each grid
    step streams ~8 MiB of input across both operands; clip to the spatial
    extent and to the double-buffered VMEM budget."""
    if requested is None:
        requested = max(1024, (8 << 20) // (tile_nc * bytes_both))
    tile_s = min(_round_up(requested, 128), _round_up(s, 128))
    # footprint ~= 2 pipeline buffers * tile_nc * tile_s * (x_item + t_item)
    max_s = vmem_budget_bytes // (2 * tile_nc * bytes_both)
    max_s = max(128, (max_s // 128) * 128)
    return max(128, min(tile_s, max_s))


def _dice_kernel_factory(smooth, s_total, tile_nc, tile_s, ragged, apply_sigmoid):
    n_chunks = tile_s // 128

    def dice_kernel(x_ref, t_ref, dice_ref, inter_acc, denom_acc):
        k = pl.program_id(1)
        nk = pl.num_programs(1)

        @pl.when(k == 0)
        def _():
            inter_acc[...] = jnp.zeros_like(inter_acc)
            denom_acc[...] = jnp.zeros_like(denom_acc)

        def load():
            x = x_ref[...].astype(jnp.float32)
            t = t_ref[...].astype(jnp.float32)
            if apply_sigmoid:
                # sigmoid(x) == 0.5*tanh(0.5*x)+0.5: one EUP op instead of exp+recip.
                x = 0.5 * jnp.tanh(0.5 * x) + 0.5
            return x, t

        def accumulate(x, t):
            # Lane-dense partial sums: pure VPU adds over 128-lane chunks; the
            # single cross-lane (XLU) reduction is deferred to the epilogue.
            p_acc = None
            s_acc = None
            for c in range(n_chunks):
                sl = slice(c * 128, (c + 1) * 128)
                xc = x[:, sl]
                tc = t[:, sl]
                pc = xc * tc
                sc = xc + tc
                p_acc = pc if p_acc is None else p_acc + pc
                s_acc = sc if s_acc is None else s_acc + sc
            inter_acc[...] += p_acc
            denom_acc[...] += s_acc

        if ragged:
            # Only the final S-block is ragged: keep the mask off the
            # steady-state path.
            @pl.when(k < nk - 1)
            def _():
                x, t = load()
                accumulate(x, t)

            @pl.when(k == nk - 1)
            def _():
                x, t = load()
                lane = jax.lax.broadcasted_iota(jnp.int32, x.shape, dimension=1)
                valid = lane < (s_total - k * tile_s)
                # Mask AFTER the optional sigmoid so garbage lanes contribute 0.
                x = jnp.where(valid, x, 0.0)
                t = jnp.where(valid, t, 0.0)
                accumulate(x, t)
        else:
            x, t = load()
            accumulate(x, t)

        @pl.when(k == nk - 1)
        def _():
            inter = jnp.sum(inter_acc[...], axis=-1, keepdims=True)
            denom = jnp.sum(denom_acc[...], axis=-1, keepdims=True)
            dice_ref[...] = (2.0 * inter + smooth) / (denom + smooth)

    return dice_kernel


@functools.partial(
    jax.jit,
    static_argnames=(
        "size_average", "smooth", "apply_sigmoid", "tile_s", "tile_nc",
        "vmem_budget_bytes",
    ),
)
def dice_loss(inputs, targets, *, weight=None, size_average=True, smooth=1.0,
              apply_sigmoid=False, tile_s=None, tile_nc=None,
              vmem_budget_bytes=None):
    """Mirrors DiceLoss.forward (NCDHW inputs; per-(n,c) dice then mean)."""
    if targets.ndim != inputs.ndim:
        # Intended torch behaviour (the original has an `on_hot` typo): one-hot
        # integer labels to NCDHW.  Built with the class axis already in
        # position 1 (no moveaxis transpose copy); 0/1 values are exact in
        # bfloat16, halving the target HBM stream.
        # TODO(synk): fuse the one-hot into the kernel (stream int labels and
        # compare against the class index per block) to cut target traffic C-fold.
        num_classes = inputs.shape[1]
        cls_shape = (1, num_classes) + (1,) * (inputs.ndim - 2)
        classes = jnp.arange(num_classes, dtype=jnp.int32).reshape(cls_shape)
        targets = (targets[:, None, ...].astype(jnp.int32) == classes
                   ).astype(jnp.bfloat16)
    assert inputs.shape == targets.shape

    N, C = inputs.shape[0], inputs.shape[1]
    S = 1
    for d in inputs.shape[2:]:
        S *= d
    NC = N * C

    x2d = inputs.reshape(NC, S)   # dtype preserved (bf16 inputs halve HBM traffic)
    t2d = targets.reshape(NC, S)

    x_item = x2d.dtype.itemsize
    t_item = t2d.dtype.itemsize
    bytes_both = x_item + t_item

    # VMEM budget / limit derived from hardware capacity (v7x has 64 MiB).
    try:
        vmem_cap = int(pltpu.get_tpu_info().vmem_capacity_bytes)
    except Exception:
        vmem_cap = 64 << 20
    auto_budget = (vmem_cap * 3) // 8
    budget = auto_budget if vmem_budget_bytes is None else min(
        int(vmem_budget_bytes), auto_budget)

    if tile_nc is None:
        tile_nc = _pick_tile_nc(NC, min(x_item, t_item))
    tile_s_eff = _pick_tile_s(S, tile_nc, bytes_both, tile_s, budget)

    num_nc_blocks = NC // tile_nc
    num_s_blocks = pl.cdiv(S, tile_s_eff)
    ragged = (S % tile_s_eff) != 0

    footprint = 2 * tile_nc * tile_s_eff * bytes_both  # 2 pipeline buffers / input
    vmem_limit = int(min((vmem_cap * 3) // 4, max(32 << 20, 3 * footprint)))

    kernel = _dice_kernel_factory(
        float(smooth), S, tile_nc, tile_s_eff, ragged, apply_sigmoid
    )

    dice = pl.pallas_call(
        kernel,
        out_shape=jax.ShapeDtypeStruct((NC, 1), jnp.float32),
        grid_spec=pltpu.PrefetchScalarGridSpec(
            num_scalar_prefetch=0,
            grid=(num_nc_blocks, num_s_blocks),
            in_specs=[
                pl.BlockSpec((tile_nc, tile_s_eff), lambda i, k: (i, k)),
                pl.BlockSpec((tile_nc, tile_s_eff), lambda i, k: (i, k)),
            ],
            out_specs=pl.BlockSpec((tile_nc, 1), lambda i, k: (i, 0)),
            scratch_shapes=[
                pltpu.VMEM((tile_nc, 128), jnp.float32),
                pltpu.VMEM((tile_nc, 128), jnp.float32),
            ],
        ),
        compiler_params=pltpu.CompilerParams(
            dimension_semantics=("parallel", "arbitrary"),
            vmem_limit_bytes=vmem_limit,
        ),
    )(x2d, t2d)

    dice = dice.reshape(N, C)
    if weight is not None:
        # Matches the torch module: broadcast multiply, then unweighted mean.
        dice = weight * dice
    if size_average:
        return 1.0 - jnp.mean(dice)
    return 1.0 - dice


def _reference_dice_loss(inputs, targets, smooth=1.0):
    axes = tuple(range(2, inputs.ndim))
    inter = jnp.sum(inputs * targets, axis=axes)
    dice = (2.0 * inter + smooth) / (
        jnp.sum(inputs, axis=axes) + jnp.sum(targets, axis=axes) + smooth
    )
    return 1.0 - jnp.mean(dice)


if __name__ == "__main__":
    key = jax.random.PRNGKey(0)
    k1, k2, k3, k4, k5 = jax.random.split(key, 5)

    # Test 1: small NCDHW, S divisible by the tile (non-ragged path).
    N, C, D, H, W = 2, 4, 4, 8, 8
    logits = jax.random.normal(k1, (N, C, D, H, W), dtype=jnp.float32)
    probs = jax.nn.sigmoid(logits)
    targets = (jax.random.uniform(k2, (N, C, D, H, W)) > 0.5).astype(jnp.float32)

    loss = jax.block_until_ready(dice_loss(probs, targets, smooth=1.0))
    ref = jax.block_until_ready(_reference_dice_loss(probs, targets, smooth=1.0))
    assert jnp.allclose(loss, ref, rtol=1e-5, atol=1e-5), (loss, ref)

    # Test 2: ragged spatial extent (S = 3*5*7 = 105) + fused sigmoid path.
    N2, C2, D2, H2, W2 = 2, 3, 3, 5, 7
    logits2 = jax.random.normal(k3, (N2, C2, D2, H2, W2), dtype=jnp.float32)
    targets2 = (jax.random.uniform(k4, (N2, C2, D2, H2, W2)) > 0.5).astype(jnp.float32)

    loss2 = jax.block_until_ready(
        dice_loss(logits2, targets2, smooth=1.0, apply_sigmoid=True)
    )
    ref2 = jax.block_until_ready(
        _reference_dice_loss(jax.nn.sigmoid(logits2), targets2, smooth=1.0)
    )
    assert jnp.allclose(loss2, ref2, rtol=1e-5, atol=1e-5), (loss2, ref2)

    # Test 3: integer-label path (one-hot built in the wrapper, bf16 targets).
    labels = jax.random.randint(k5, (N, D, H, W), 0, C)
    loss3 = jax.block_until_ready(dice_loss(probs, labels, smooth=1.0))
    onehot = jnp.moveaxis(jax.nn.one_hot(labels, C, dtype=jnp.float32), -1, 1)
    ref3 = jax.block_until_ready(_reference_dice_loss(probs, onehot, smooth=1.0))
    assert jnp.allclose(loss3, ref3, rtol=1e-5, atol=1e-5), (loss3, ref3)

    print("KERNEL_OK")
</pallas_src>

<mosaic_0001>
module attributes {stable_mosaic.version = 11 : i64} {
  func.func @dice_kernel(%arg0: i32, %arg1: i32, %arg2: memref<8x256xf32, #tpu.memory_space<vmem>>, %arg3: memref<8x256xf32, #tpu.memory_space<vmem>>, %arg4: memref<8x1xf32, #tpu.memory_space<vmem>>, %arg5: memref<8x128xf32, #tpu.memory_space<vmem>>, %arg6: memref<8x128xf32, #tpu.memory_space<vmem>>) attributes {dimension_semantics = [#tpu.dimension_semantics<parallel>, #tpu.dimension_semantics<arbitrary>], iteration_bounds = array<i64: 1, 1>, scalar_prefetch = 0 : i64, scratch_operands = 2 : i64, tpu.core_type = #tpu.core_type<tc>, window_params = [{transform_indices = @transform_0, window_bounds = array<i64: 8, 256>}, {transform_indices = @transform_1, window_bounds = array<i64: 8, 256>}, {transform_indices = @transform_2, window_bounds = array<i64: 8, 1>}]} {
    %c0_i32 = arith.constant 0 : i32
    %0 = arith.cmpi eq, %arg1, %c0_i32 : i32
    %1 = arith.extui %0 : i1 to i32
    %c0_i32_0 = arith.constant 0 : i32
    %2 = arith.cmpi ne, %1, %c0_i32_0 : i32
    scf.if %2 {
      %cst = arith.constant 0.000000e+00 : f32
      %24 = vector.broadcast %cst : f32 to vector<8x128xf32>
      %c0_14 = arith.constant 0 : index
      %c0_15 = arith.constant 0 : index
      %25 = vector.load %arg5[%c0_14, %c0_15] : memref<8x128xf32, #tpu.memory_space<vmem>>, vector<8x128xf32>
      tpu.vector_store %arg5[%c0_14, %c0_15], %24 {strides = array<i32>} : memref<8x128xf32, #tpu.memory_space<vmem>>, vector<8x128xf32>,
      %cst_16 = arith.constant 0.000000e+00 : f32
      %26 = vector.broadcast %cst_16 : f32 to vector<8x128xf32>
      %c0_17 = arith.constant 0 : index
      %c0_18 = arith.constant 0 : index
      %27 = vector.load %arg6[%c0_17, %c0_18] : memref<8x128xf32, #tpu.memory_space<vmem>>, vector<8x128xf32>
      tpu.vector_store %arg6[%c0_17, %c0_18], %26 {strides = array<i32>} : memref<8x128xf32, #tpu.memory_space<vmem>>, vector<8x128xf32>,
    } else {
    }
    %c0 = arith.constant 0 : index
    %c0_1 = arith.constant 0 : index
    %3 = vector.load %arg2[%c0, %c0_1] : memref<8x256xf32, #tpu.memory_space<vmem>>, vector<8x256xf32>
    %c0_2 = arith.constant 0 : index
    %c0_3 = arith.constant 0 : index
    %4 = vector.load %arg3[%c0_2, %c0_3] : memref<8x256xf32, #tpu.memory_space<vmem>>, vector<8x256xf32>
    %5 = vector.extract_strided_slice %3 {offsets = [0, 0], sizes = [8, 128], strides = [1, 1]} : vector<8x256xf32> to vector<8x128xf32>
    %6 = vector.extract_strided_slice %4 {offsets = [0, 0], sizes = [8, 128], strides = [1, 1]} : vector<8x256xf32> to vector<8x128xf32>
    %7 = arith.mulf %5, %6 : vector<8x128xf32>
    %8 = arith.addf %5, %6 : vector<8x128xf32>
    %9 = vector.extract_strided_slice %3 {offsets = [0, 128], sizes = [8, 128], strides = [1, 1]} : vector<8x256xf32> to vector<8x128xf32>
    %10 = vector.extract_strided_slice %4 {offsets = [0, 128], sizes = [8, 128], strides = [1, 1]} : vector<8x256xf32> to vector<8x128xf32>
    %11 = arith.mulf %9, %10 : vector<8x128xf32>
    %12 = arith.addf %9, %10 : vector<8x128xf32>
    %13 = arith.addf %7, %11 : vector<8x128xf32>
    %14 = arith.addf %8, %12 : vector<8x128xf32>
    %c0_4 = arith.constant 0 : index
    %c0_5 = arith.constant 0 : index
    %15 = vector.load %arg5[%c0_4, %c0_5] : memref<8x128xf32, #tpu.memory_space<vmem>>, vector<8x128xf32>
    %16 = arith.addf %15, %13 : vector<8x128xf32>
    %c0_6 = arith.constant 0 : index
    %c0_7 = arith.constant 0 : index
    %17 = vector.load %arg5[%c0_6, %c0_7] : memref<8x128xf32, #tpu.memory_space<vmem>>, vector<8x128xf32>
    tpu.vector_store %arg5[%c0_6, %c0_7], %16 {strides = array<i32>} : memref<8x128xf32, #tpu.memory_space<vmem>>, vector<8x128xf32>,
    %c0_8 = arith.constant 0 : index
    %c0_9 = arith.constant 0 : index
    %18 = vector.load %arg6[%c0_8, %c0_9] : memref<8x128xf32, #tpu.memory_space<vmem>>, vector<8x128xf32>
    %19 = arith.addf %18, %14 : vector<8x128xf32>
    %c0_10 = arith.constant 0 : index
    %c0_11 = arith.constant 0 : index
    %20 = vector.load %arg6[%c0_10, %c0_11] : memref<8x128xf32, #tpu.memory_space<vmem>>, vector<8x128xf32>
    tpu.vector_store %arg6[%c0_10, %c0_11], %19 {strides = array<i32>} : memref<8x128xf32, #tpu.memory_space<vmem>>, vector<8x128xf32>,
    %c0_i32_12 = arith.constant 0 : i32
    %21 = arith.cmpi eq, %arg1, %c0_i32_12 : i32
    %22 = arith.extui %21 : i1 to i32
    %c0_i32_13 = arith.constant 0 : i32
    %23 = arith.cmpi ne, %22, %c0_i32_13 : i32
    scf.if %23 {
      %c0_14 = arith.constant 0 : index
      %c0_15 = arith.constant 0 : index
      %24 = vector.load %arg5[%c0_14, %c0_15] : memref<8x128xf32, #tpu.memory_space<vmem>>, vector<8x128xf32>
      %cst = arith.constant dense<0.000000e+00> : vector<8xf32>
      %25 = vector.multi_reduction <add>, %24, %cst [1] : vector<8x128xf32> to vector<8xf32>
      %26 = vector.shape_cast %25 : vector<8xf32> to vector<8x1xf32>
      %c0_16 = arith.constant 0 : index
      %c0_17 = arith.constant 0 : index
      %27 = vector.load %arg6[%c0_16, %c0_17] : memref<8x128xf32, #tpu.memory_space<vmem>>, vector<8x128xf32>
      %cst_18 = arith.constant dense<0.000000e+00> : vector<8xf32>
      %28 = vector.multi_reduction <add>, %27, %cst_18 [1] : vector<8x128xf32> to vector<8xf32>
      %29 = vector.shape_cast %28 : vector<8xf32> to vector<8x1xf32>
      %cst_19 = arith.constant 2.000000e+00 : f32
      %30 = vector.broadcast %cst_19 : f32 to vector<8x1xf32>
      %31 = arith.mulf %30, %26 : vector<8x1xf32>
      %cst_20 = arith.constant 1.000000e+00 : f32
      %32 = vector.broadcast %cst_20 : f32 to vector<8x1xf32>
      %33 = arith.addf %31, %32 : vector<8x1xf32>
      %cst_21 = arith.constant 1.000000e+00 : f32
      %34 = vector.broadcast %cst_21 : f32 to vector<8x1xf32>
      %35 = arith.addf %29, %34 : vector<8x1xf32>
      %36 = arith.divf %33, %35 : vector<8x1xf32>
      %c0_22 = arith.constant 0 : index
      %c0_23 = arith.constant 0 : index
      %37 = vector.load %arg4[%c0_22, %c0_23] : memref<8x1xf32, #tpu.memory_space<vmem>>, vector<8x1xf32>
      tpu.vector_store %arg4[%c0_22, %c0_23], %36 {strides = array<i32>} : memref<8x1xf32, #tpu.memory_space<vmem>>, vector<8x1xf32>,
    } else {
    }
    return
  }
  func.func @transform_0(%arg0: i32, %arg1: i32) -> (i32, i32) {
    %c0_i32 = arith.constant 0 : i32
    return %arg0, %arg1 : i32, i32
  }
  func.func @transform_1(%arg0: i32, %arg1: i32) -> (i32, i32) {
    %c0_i32 = arith.constant 0 : i32
    return %arg0, %arg1 : i32, i32
  }
  func.func @transform_2(%arg0: i32, %arg1: i32) -> (i32, i32) {
    %c0_i32 = arith.constant 0 : i32
    %c0_i32_0 = arith.constant 0 : i32
    return %arg0, %c0_i32 : i32, i32
  }
}

</mosaic_0001>

<llo_original>
// kernel: dice_loss.1
$region0: #{dice_loss.1}
  #allocation0 [shape = 'u32[]', space=smem, size = 0x4, offset = 0x4, fixed_abs, tag = 'smem constant byte address 0x4 - core index']
  #allocation1 [shape = 'u32[144,128]{1,0:T(1,128)}', space=vmem, size = 0x12000, scoped, tag = 'internal scratch']
  #allocation2 [shape = 'f32[8,128]{1,0:T(8,128)}', space=vmem, size = 0x1000, scoped, tag = 'scratch operand']
  #allocation3 [shape = 'f32[8,128]{1,0:T(8,128)}', space=vmem, size = 0x1000, scoped, tag = 'scratch operand']
  %s0 = inlined_call_operand.vmem [shape: f32[8,256], index: 0, kind: input, shape index: {}]
  %s1 = inlined_call_operand.vmem [shape: f32[8,256], index: 1, kind: input, shape index: {}]
  %s2 = inlined_call_operand.vmem [shape: f32[8,1], index: 2, kind: output, shape index: {}]
  %s3 = sld [smem:[#allocation0]]
  $region26: #{dice_loss.1} parent=0
    _
  %s5 = ssub.s32 1, %s3
  %s6 = scalar_select 0, %s5, %s3
  // Predicated region
  $region2: #{dice_loss.1} parent=0 // pred_check
    _
  $region3: #{dice_loss.1} parent=0 // pred_check_branch
    %8 = sbr.rel (0) target = $region5
  $region4: #{dice_loss.1} parent=0 // pred_region
    _
  $region5: #{dice_loss.1} parent=0 // pred_fallthru
    _
  // Predicated region
  $region6: #{dice_loss.1} parent=0 // pred_check
    _
  $region7: #{dice_loss.1} parent=0 // pred_check_branch
    %10 = sbr.rel (0) target = $region9
  $region8: #{dice_loss.1} parent=0 // pred_region
    _
  $region9: #{dice_loss.1} parent=0 // pred_fallthru
    _
  %p11 = scmp.eq.s32.totalorder 0, 0
  // Predicated region
  $region10: #{dice_loss.1} parent=0 // pred_check
    %p12 = pneg %p11
  $region11: #{dice_loss.1} parent=0 // pred_check_branch
    %14 = sbr.rel (%p12) target = $region13
  $region12: #{dice_loss.1} parent=0 // pred_region
    %15 = vst [vmem:[#allocation2] sm:$0xff] 0.0
    %16 = vst [vmem:[#allocation3] sm:$0xff] 0.0
  $region13: #{dice_loss.1} parent=0 // pred_fallthru
    _
  %v17 = vld [vmem:[%s0] sm:$0xff]
  %v18 = vld [vmem:[%s0 + $0x8] sm:$0xff]
  %v19 = vld [vmem:[%s1] sm:$0xff]
  %v20 = vld [vmem:[%s1 + $0x8] sm:$0xff]
  %v21 = vmul.f32 %v17, %v19
  %v22 = vadd.f32 %v17, %v19
  %v23 = vmul.f32 %v18, %v20
  %v24 = vadd.f32 %v18, %v20
  %v25 = vadd.f32 %v21, %v23
  %v26 = vadd.f32 %v22, %v24
  %v27 = vld [vmem:[#allocation2] sm:$0xff]
  %v28 = vadd.f32 %v27, %v25
  %29 = vst [vmem:[#allocation2] sm:$0xff] %v28
  %v30 = vld [vmem:[#allocation3] sm:$0xff]
  %v31 = vadd.f32 %v30, %v26
  %32 = vst [vmem:[#allocation3] sm:$0xff] %v31
  // Predicated region
  $region14: #{dice_loss.1} parent=0 // pred_check
    %p33 = pneg %p11
  $region15: #{dice_loss.1} parent=0 // pred_check_branch
    %35 = sbr.rel (%p33) target = $region17
  $region16: #{dice_loss.1} parent=0 // pred_region
    %v36 = vld [vmem:[#allocation2] sm:$0xff]
    %37 = vadd.xlane.f32.xlu0 %v36
    %v38 = vpop.xlane.xlu0 %37
    %v39 = vld [vmem:[#allocation3] sm:$0xff]
    %40 = vadd.xlane.f32.xlu0 %v39
    %v41 = vpop.xlane.xlu0 %40
    %v42 = vmul.f32 %v38, 2.0
    %v43 = vadd.f32 %v42, 1.0
    %v44 = vadd.f32 %v41, 1.0
    %v45 = vrcp.pop %v44
    %v46 = vmul.f32 %v43, %v45
    %vm47 = vcmask 7168
    %48 = vst.msk [vmem:[%s2] sm:$0xff] %vm47, %v46
  $region17: #{dice_loss.1} parent=0 // pred_fallthru
    _
  // Predicated region
  $region18: #{dice_loss.1} parent=0 // pred_check
    _
  $region19: #{dice_loss.1} parent=0 // pred_check_branch
    %50 = sbr.rel (0) target = $region21
  $region20: #{dice_loss.1} parent=0 // pred_region
    _
  $region21: #{dice_loss.1} parent=0 // pred_fallthru
    _
  // Predicated region
  $region22: #{dice_loss.1} parent=0 // pred_check
    _
  $region23: #{dice_loss.1} parent=0 // pred_check_branch
    %52 = sbr.rel (0) target = $region25
  $region24: #{dice_loss.1} parent=0 // pred_region
    _
  $region25: #{dice_loss.1} parent=0 // pred_fallthru
    _

</llo_original>
